<compile_context>
chip_gen: v6e
topology: v6e:2x2x1
jax: 0.10.0
libtpu: 0.0.40
codegen_flags: <defaults>
</compile_context>

<pallas_src>
import functools

import jax
import jax.numpy as jnp
from jax.experimental import pallas as pl
from jax.experimental.pallas import tpu as pltpu

FEATURE_D = 512
EPS = 1e-5


def _bn_kernel(x_ref, gamma_ref, beta_ref, o_ref):
    # x_ref:     (N, 512)   full batch, full channel width (lane-dense), VMEM
    # gamma_ref: (1, 512)
    # beta_ref:  (1, 512)
    x = x_ref[...].astype(jnp.float32)
    n = x.shape[0]
    inv_n = 1.0 / n

    # One-pass per-channel batch statistics (reduction over axis 0 = batch).
    s = jnp.sum(x, axis=0, keepdims=True)
    ss = jnp.sum(x * x, axis=0, keepdims=True)
    mean = s * inv_n
    # Biased variance (as PyTorch uses for normalization); clamp against
    # cancellation in E[x^2] - mean^2.
    var = jnp.maximum(ss * inv_n - mean * mean, 0.0)
    inv_std = jax.lax.rsqrt(var + EPS)  # EUP — effectively free here

    gamma = gamma_ref[...].astype(jnp.float32)
    beta = beta_ref[...].astype(jnp.float32)

    # Fold affine + normalization into per-channel scale/shift (1, C) vectors,
    # so the (N, C) pass is a single mul+add per element.
    scale = inv_std * gamma
    shift = beta - mean * scale

    # Re-load x from VMEM for the output pass so the stats-phase value's live
    # range can end after the reductions (vreg-pressure hygiene, ~free load).
    o_ref[...] = (x_ref[...].astype(jnp.float32) * scale + shift).astype(o_ref.dtype)


@functools.partial(jax.jit)
def _batchnorm1d_2d(x2d, gamma, beta):
    # x2d: (N, FEATURE_D)
    n, c = x2d.shape
    assert c == FEATURE_D
    gamma2d = gamma.reshape(1, c)
    beta2d = beta.reshape(1, c)
    # No grid: whole-array VMEM blocks, single DMA in/out, no pipelining
    # machinery or double buffering for a 1-step problem.
    return pl.pallas_call(
        _bn_kernel,
        out_shape=jax.ShapeDtypeStruct((n, c), x2d.dtype),
        in_specs=[
            pl.BlockSpec(memory_space=pltpu.MemorySpace.VMEM),
            pl.BlockSpec(memory_space=pltpu.MemorySpace.VMEM),
            pl.BlockSpec(memory_space=pltpu.MemorySpace.VMEM),
        ],
        out_specs=pl.BlockSpec(memory_space=pltpu.MemorySpace.VMEM),
    )(x2d, gamma2d, beta2d)


def task_norm_forward(x, gamma, beta):
    """Mirrors Task_norm.forward (training-mode BatchNorm1d)."""
    if x.ndim == 3:
        xf = x.reshape(-1, FEATURE_D)
        out = _batchnorm1d_2d(xf, gamma, beta)
        return out.reshape(5, -1, FEATURE_D)  # matches the module's hardcoded 5
    else:
        return _batchnorm1d_2d(x, gamma, beta)


def _reference(x, gamma, beta):
    orig_shape = x.shape
    if x.ndim == 3:
        x = x.reshape(-1, FEATURE_D)
    xf = x.astype(jnp.float32)
    mean = jnp.mean(xf, axis=0, keepdims=True)
    var = jnp.mean((xf - mean) ** 2, axis=0, keepdims=True)
    out = (xf - mean) / jnp.sqrt(var + EPS) * gamma.reshape(1, -1) + beta.reshape(1, -1)
    if len(orig_shape) == 3:
        out = out.reshape(5, -1, FEATURE_D)
    return out


if __name__ == "__main__":
    key = jax.random.PRNGKey(0)

    # Parameters, matching nn.BatchNorm1d(512, affine=True) __init__ defaults:
    # weight (gamma) = ones, bias (beta) = zeros. Deterministic, no checkpoint.
    gamma = jnp.ones((FEATURE_D,), jnp.float32)
    beta = jnp.zeros((FEATURE_D,), jnp.float32)

    # 3D branch input: (5, K, 512) -> flattened to (40, 512) inside forward.
    x3 = jax.random.normal(key, (5, 8, FEATURE_D), dtype=jnp.float32)

    out3 = jax.block_until_ready(task_norm_forward(x3, gamma, beta))
    ref3 = _reference(x3, gamma, beta)
    assert out3.shape == (5, 8, FEATURE_D)
    assert jnp.allclose(out3, ref3, atol=1e-4, rtol=1e-4), "3D branch mismatch"

    # 2D branch: (N, 512).
    x2 = jax.random.normal(jax.random.PRNGKey(1), (16, FEATURE_D), dtype=jnp.float32)
    out2 = jax.block_until_ready(task_norm_forward(x2, gamma, beta))
    ref2 = _reference(x2, gamma, beta)
    assert out2.shape == (16, FEATURE_D)
    assert jnp.allclose(out2, ref2, atol=1e-4, rtol=1e-4), "2D branch mismatch"

    print("KERNEL_OK")
</pallas_src>

<mosaic_0001>
module attributes {stable_mosaic.version = 11 : i64} {
  func.func @_bn_kernel(%arg0: memref<40x512xf32, #tpu.memory_space<vmem>>, %arg1: memref<1x512xf32, #tpu.memory_space<vmem>>, %arg2: memref<1x512xf32, #tpu.memory_space<vmem>>, %arg3: memref<40x512xf32, #tpu.memory_space<vmem>>) attributes {dimension_semantics = [], scalar_prefetch = 0 : i64, scratch_operands = 0 : i64, tpu.core_type = #tpu.core_type<tc>} {
    %c0 = arith.constant 0 : index
    %c0_0 = arith.constant 0 : index
    %0 = vector.load %arg0[%c0, %c0_0] : memref<40x512xf32, #tpu.memory_space<vmem>>, vector<40x512xf32>
    %cst = arith.constant dense<0.000000e+00> : vector<512xf32>
    %1 = vector.multi_reduction <add>, %0, %cst [0] : vector<40x512xf32> to vector<512xf32>
    %2 = vector.shape_cast %1 : vector<512xf32> to vector<1x512xf32>
    %3 = arith.mulf %0, %0 : vector<40x512xf32>
    %cst_1 = arith.constant dense<0.000000e+00> : vector<512xf32>
    %4 = vector.multi_reduction <add>, %3, %cst_1 [0] : vector<40x512xf32> to vector<512xf32>
    %5 = vector.shape_cast %4 : vector<512xf32> to vector<1x512xf32>
    %cst_2 = arith.constant 2.500000e-02 : f32
    %6 = vector.broadcast %cst_2 : f32 to vector<1x512xf32>
    %7 = arith.mulf %2, %6 : vector<1x512xf32>
    %cst_3 = arith.constant 2.500000e-02 : f32
    %8 = vector.broadcast %cst_3 : f32 to vector<1x512xf32>
    %9 = arith.mulf %5, %8 : vector<1x512xf32>
    %10 = arith.mulf %7, %7 : vector<1x512xf32>
    %11 = arith.subf %9, %10 : vector<1x512xf32>
    %cst_4 = arith.constant 0.000000e+00 : f32
    %12 = vector.broadcast %cst_4 : f32 to vector<1x512xf32>
    %13 = arith.maximumf %11, %12 : vector<1x512xf32>
    %cst_5 = arith.constant 9.99999974E-6 : f32
    %14 = vector.broadcast %cst_5 : f32 to vector<1x512xf32>
    %15 = arith.addf %13, %14 : vector<1x512xf32>
    %16 = math.rsqrt %15 : vector<1x512xf32>
    %c0_6 = arith.constant 0 : index
    %c0_7 = arith.constant 0 : index
    %17 = vector.load %arg1[%c0_6, %c0_7] : memref<1x512xf32, #tpu.memory_space<vmem>>, vector<1x512xf32>
    %c0_8 = arith.constant 0 : index
    %c0_9 = arith.constant 0 : index
    %18 = vector.load %arg2[%c0_8, %c0_9] : memref<1x512xf32, #tpu.memory_space<vmem>>, vector<1x512xf32>
    %19 = arith.mulf %16, %17 : vector<1x512xf32>
    %20 = arith.mulf %7, %19 : vector<1x512xf32>
    %21 = arith.subf %18, %20 : vector<1x512xf32>
    %c0_10 = arith.constant 0 : index
    %c0_11 = arith.constant 0 : index
    %22 = vector.load %arg0[%c0_10, %c0_11] : memref<40x512xf32, #tpu.memory_space<vmem>>, vector<40x512xf32>
    %23 = vector.broadcast %19 : vector<1x512xf32> to vector<40x512xf32>
    %24 = arith.mulf %22, %23 : vector<40x512xf32>
    %25 = vector.broadcast %21 : vector<1x512xf32> to vector<40x512xf32>
    %26 = arith.addf %24, %25 : vector<40x512xf32>
    %c0_12 = arith.constant 0 : index
    %c0_13 = arith.constant 0 : index
    %27 = vector.load %arg3[%c0_12, %c0_13] : memref<40x512xf32, #tpu.memory_space<vmem>>, vector<40x512xf32>
    tpu.vector_store %arg3[%c0_12, %c0_13], %26 {strides = array<i32>} : memref<40x512xf32, #tpu.memory_space<vmem>>, vector<40x512xf32>,
    return
  }
}

</mosaic_0001>

<llo_original>
// kernel: _batchnorm1d_2d.1
$region0: #{_batchnorm1d_2d.1}
  #allocation0 [shape = 'u32[]', space=smem, size = 0x4, offset = 0x4, fixed_abs, tag = 'smem constant byte address 0x4 - core index']
  #allocation1 [shape = 'u32[144,128]{1,0:T(1,128)}', space=vmem, size = 0x12000, scoped, tag = 'internal scratch']
  %s0 = inlined_call_operand.hbm [shape: f32[40,512], index: 0, kind: input, shape index: {}]
  %s1 = inlined_call_operand.vmem [shape: f32[1,512], index: 1, kind: input, shape index: {}]
  %s2 = inlined_call_operand.hbm [shape: f32[1,512], index: 2, kind: input, shape index: {}]
  %s3 = inlined_call_operand.hbm [shape: f32[40,512], index: 3, kind: output, shape index: {}]
  %s4 = sld [smem:[#allocation0]]
  $region30: #{_batchnorm1d_2d.1} parent=0
    _
  %s6 = ssub.s32 1, %s4
  %s7 = scalar_select 0, %s6, %s4
  $region1: #{_batchnorm1d_2d.1} parent=0
    #allocation2 [shape = 'u8[81920]{0}', space=vmem, size = 0x14000, scoped, tag = 'input window, operand 0, single buffered']
    #allocation3 [shape = 's32[1]{0}', space=sflag, size = 0x4, scoped, tag = 'scoped memory for _batchnorm1d_2d.1']
    #allocation4 [shape = 's32[1]{0}', space=sflag, size = 0x4, scoped, tag = 'scoped memory for _batchnorm1d_2d.1']
    #allocation5 [shape = 'u8[2048]{0}', space=vmem, size = 0x800, scoped, tag = 'input window, operand 2, single buffered']
    #allocation6 [shape = 's32[1]{0}', space=sflag, size = 0x4, scoped, tag = 'scoped memory for _batchnorm1d_2d.1']
    #allocation7 [shape = 'u8[81920]{0}', space=vmem, size = 0x14000, scoped, tag = 'output window, operand 0, single buffered']
    %8 = vsyncpa [#allocation3], 0
    %9 = vsyncpa [#allocation6], 0
    %10 = vsyncpa [#allocation4], 0
    // Predicated region
    $region2: #{_batchnorm1d_2d.1} parent=1 // pred_check
      _
    $region3: #{_batchnorm1d_2d.1} parent=1 // pred_check_branch
      %12 = sbr.rel (0) target = $region5
    $region4: #{_batchnorm1d_2d.1} parent=1 // pred_region
      %s14 = ssub.s32 2560, 2560
      %15 = vsyncadd [#allocation3], %s14
      %s16 = sshll.u32 [#allocation2], 4
      %s17 = int_to_ptr.vmem [resolvable:$true] %s16
      %22 = dma.hbm_to_vmem [thread:$0]  %s0, 2560, %s17, [#allocation3], 512, 512, 32
    $region5: #{_batchnorm1d_2d.1} parent=1 // pred_fallthru
      _
    // Predicated region
    $region6: #{_batchnorm1d_2d.1} parent=1 // pred_check
      _
    $region7: #{_batchnorm1d_2d.1} parent=1 // pred_check_branch
      %24 = sbr.rel (0) target = $region9
    $region8: #{_batchnorm1d_2d.1} parent=1 // pred_region
      _
    $region9: #{_batchnorm1d_2d.1} parent=1 // pred_fallthru
      _
    // Predicated region
    $region10: #{_batchnorm1d_2d.1} parent=1 // pred_check
      _
    $region11: #{_batchnorm1d_2d.1} parent=1 // pred_check_branch
      %26 = sbr.rel (0) target = $region13
    $region12: #{_batchnorm1d_2d.1} parent=1 // pred_region
      %s28 = ssub.s32 64, 64
      %29 = vsyncadd [#allocation6], %s28
      %s31 = sshll.u32 [#allocation5], 4
      %s32 = int_to_ptr.vmem [resolvable:$true] %s31
      %34 = dma.hbm_to_vmem [thread:$0]  %s2, 64, %s32, [#allocation6]
    $region13: #{_batchnorm1d_2d.1} parent=1 // pred_fallthru
      _
    // Predicated region
    $region14: #{_batchnorm1d_2d.1} parent=1 // pred_check
      _
    $region15: #{_batchnorm1d_2d.1} parent=1 // pred_check_branch
      %36 = sbr.rel (0) target = $region17
    $region16: #{_batchnorm1d_2d.1} parent=1 // pred_region
      %37 = dma.done [#allocation3], 2560
    $region17: #{_batchnorm1d_2d.1} parent=1 // pred_fallthru
      _
    // Predicated region
    $region18: #{_batchnorm1d_2d.1} parent=1 // pred_check
      _
    $region19: #{_batchnorm1d_2d.1} parent=1 // pred_check_branch
      %39 = sbr.rel (0) target = $region21
    $region20: #{_batchnorm1d_2d.1} parent=1 // pred_region
      %40 = dma.done [#allocation6], 64
    $region21: #{_batchnorm1d_2d.1} parent=1 // pred_fallthru
      _
    %v41 = vld [vmem:[#allocation2] sm:$0xff]
    %v42 = vld [vmem:[#allocation2 + $0x8] sm:$0xff]
    %v43 = vld [vmem:[#allocation2 + $0x10] sm:$0xff]
    %v44 = vld [vmem:[#allocation2 + $0x18] sm:$0xff]
    %v45 = vld [vmem:[#allocation2 + $0x20] sm:$0xff]
    %v46 = vld [vmem:[#allocation2 + $0x28] sm:$0xff]
    %v47 = vld [vmem:[#allocation2 + $0x30] sm:$0xff]
    %v48 = vld [vmem:[#allocation2 + $0x38] sm:$0xff]
    %v49 = vld [vmem:[#allocation2 + $0x40] sm:$0xff]
    %v50 = vld [vmem:[#allocation2 + $0x48] sm:$0xff]
    %v51 = vld [vmem:[#allocation2 + $0x50] sm:$0xff]
    %v52 = vld [vmem:[#allocation2 + $0x58] sm:$0xff]
    %v53 = vld [vmem:[#allocation2 + $0x60] sm:$0xff]
    %v54 = vld [vmem:[#allocation2 + $0x68] sm:$0xff]
    %v55 = vld [vmem:[#allocation2 + $0x70] sm:$0xff]
    %v56 = vld [vmem:[#allocation2 + $0x78] sm:$0xff]
    %v57 = vld [vmem:[#allocation2 + $0x80] sm:$0xff]
    %v58 = vld [vmem:[#allocation2 + $0x88] sm:$0xff]
    %v59 = vld [vmem:[#allocation2 + $0x90] sm:$0xff]
    %v60 = vld [vmem:[#allocation2 + $0x98] sm:$0xff]
    %v61 = vadd.f32 %v41, %v45
    %v62 = vadd.f32 %v61, %v49
    %v63 = vadd.f32 %v62, %v53
    %v64 = vadd.f32 %v63, %v57
    %v65 = vrot.slane %v64, 4
    %v66 = vadd.f32 %v64, %v65
    %v67 = vrot.slane %v66, 2
    %v68 = vadd.f32 %v66, %v67
    %v69 = vrot.slane %v68, 1
    %v70 = vadd.f32 %v68, %v69
    %v71 = vadd.f32 %v42, %v46
    %v72 = vadd.f32 %v71, %v50
    %v73 = vadd.f32 %v72, %v54
    %v74 = vadd.f32 %v73, %v58
    %v75 = vrot.slane %v74, 4
    %v76 = vadd.f32 %v74, %v75
    %v77 = vrot.slane %v76, 2
    %v78 = vadd.f32 %v76, %v77
    %v79 = vrot.slane %v78, 1
    %v80 = vadd.f32 %v78, %v79
    %v81 = vadd.f32 %v43, %v47
    %v82 = vadd.f32 %v81, %v51
    %v83 = vadd.f32 %v82, %v55
    %v84 = vadd.f32 %v83, %v59
    %v85 = vrot.slane %v84, 4
    %v86 = vadd.f32 %v84, %v85
    %v87 = vrot.slane %v86, 2
    %v88 = vadd.f32 %v86, %v87
    %v89 = vrot.slane %v88, 1
    %v90 = vadd.f32 %v88, %v89
    %v91 = vadd.f32 %v44, %v48
    %v92 = vadd.f32 %v91, %v52
    %v93 = vadd.f32 %v92, %v56
    %v94 = vadd.f32 %v93, %v60
    %v95 = vrot.slane %v94, 4
    %v96 = vadd.f32 %v94, %v95
    %v97 = vrot.slane %v96, 2
    %v98 = vadd.f32 %v96, %v97
    %v99 = vrot.slane %v98, 1
    %v100 = vadd.f32 %v98, %v99
    %v101 = vmul.f32 %v41, %v41
    %v102 = vmul.f32 %v42, %v42
    %v103 = vmul.f32 %v43, %v43
    %v104 = vmul.f32 %v44, %v44
    %v105 = vmul.f32 %v45, %v45
    %v106 = vmul.f32 %v46, %v46
    %v107 = vmul.f32 %v47, %v47
    %v108 = vmul.f32 %v48, %v48
    %v109 = vmul.f32 %v49, %v49
    %v110 = vmul.f32 %v50, %v50
    %v111 = vmul.f32 %v51, %v51
    %v112 = vmul.f32 %v52, %v52
    %v113 = vmul.f32 %v53, %v53
    %v114 = vmul.f32 %v54, %v54
    %v115 = vmul.f32 %v55, %v55
    %v116 = vmul.f32 %v56, %v56
    %v117 = vmul.f32 %v57, %v57
    %v118 = vmul.f32 %v58, %v58
    %v119 = vmul.f32 %v59, %v59
    %v120 = vmul.f32 %v60, %v60
    %v121 = vadd.f32 %v101, %v105
    %v122 = vadd.f32 %v121, %v109
    %v123 = vadd.f32 %v122, %v113
    %v124 = vadd.f32 %v123, %v117
    %v125 = vrot.slane %v124, 4
    %v126 = vadd.f32 %v124, %v125
    %v127 = vrot.slane %v126, 2
    %v128 = vadd.f32 %v126, %v127
    %v129 = vrot.slane %v128, 1
    %v130 = vadd.f32 %v128, %v129
    %v131 = vadd.f32 %v102, %v106
    %v132 = vadd.f32 %v131, %v110
    %v133 = vadd.f32 %v132, %v114
    %v134 = vadd.f32 %v133, %v118
    %v135 = vrot.slane %v134, 4
    %v136 = vadd.f32 %v134, %v135
    %v137 = vrot.slane %v136, 2
    %v138 = vadd.f32 %v136, %v137
    %v139 = vrot.slane %v138, 1
    %v140 = vadd.f32 %v138, %v139
    %v141 = vadd.f32 %v103, %v107
    %v142 = vadd.f32 %v141, %v111
    %v143 = vadd.f32 %v142, %v115
    %v144 = vadd.f32 %v143, %v119
    %v145 = vrot.slane %v144, 4
    %v146 = vadd.f32 %v144, %v145
    %v147 = vrot.slane %v146, 2
    %v148 = vadd.f32 %v146, %v147
    %v149 = vrot.slane %v148, 1
    %v150 = vadd.f32 %v148, %v149
    %v151 = vadd.f32 %v104, %v108
    %v152 = vadd.f32 %v151, %v112
    %v153 = vadd.f32 %v152, %v116
    %v154 = vadd.f32 %v153, %v120
    %v155 = vrot.slane %v154, 4
    %v156 = vadd.f32 %v154, %v155
    %v157 = vrot.slane %v156, 2
    %v158 = vadd.f32 %v156, %v157
    %v159 = vrot.slane %v158, 1
    %v160 = vadd.f32 %v158, %v159
    %v161 = vmul.f32 %v70, 0.025
    %v162 = vmul.f32 %v80, 0.025
    %v163 = vmul.f32 %v90, 0.025
    %v164 = vmul.f32 %v100, 0.025
    %v165 = vmul.f32 %v130, 0.025
    %v166 = vmul.f32 %v140, 0.025
    %v167 = vmul.f32 %v150, 0.025
    %v168 = vmul.f32 %v160, 0.025
    %v169 = vmul.f32 %v161, %v161
    %v170 = vmul.f32 %v162, %v162
    %v171 = vmul.f32 %v163, %v163
    %v172 = vmul.f32 %v164, %v164
    %v173 = vsub.f32 %v165, %v169
    %v174 = vsub.f32 %v166, %v170
    %v175 = vsub.f32 %v167, %v171
    %v176 = vsub.f32 %v168, %v172
    %v177 = vmax.f32 %v173, 0.0
    %v178 = vmax.f32 %v174, 0.0
    %v179 = vmax.f32 %v175, 0.0
    %v180 = vmax.f32 %v176, 0.0
    %v181 = vadd.f32 %v177, 1e-05
    %v182 = vadd.f32 %v178, 1e-05
    %v183 = vadd.f32 %v179, 1e-05
    %v184 = vadd.f32 %v180, 1e-05
    %v185 = vrsqrt.pop %v181
    %v186 = vrsqrt.pop %v182
    %v187 = vrsqrt.pop %v183
    %v188 = vrsqrt.pop %v184
    %v189 = vld [vmem:[%s1] sm:$0xf]
    %v190 = vld [vmem:[#allocation5] sm:$0xf]
    %v192 = vlaneseq
    %v193 = vshrl.u32 %v192, 7
    %v194 = vsub.s32 0, %v193
    %v195 = vrot.slane %v189, %v194
    %v196 = vlaneseq
    %v197 = vshrl.u32 %v196, 7
    %v198 = vsub.s32 1, %v197
    %v199 = vrot.slane %v189, %v198
    %v200 = vlaneseq
    %v201 = vshrl.u32 %v200, 7
    %v202 = vsub.s32 2, %v201
    %v203 = vrot.slane %v189, %v202
    %v204 = vlaneseq
    %v205 = vshrl.u32 %v204, 7
    %v206 = vsub.s32 3, %v205
    %v207 = vrot.slane %v189, %v206
    %v212 = vmul.f32 %v185, %v195
    %v213 = vmul.f32 %v186, %v199
    %v214 = vmul.f32 %v187, %v203
    %v215 = vmul.f32 %v188, %v207
    %v216 = vmul.f32 %v161, %v212
    %v217 = vmul.f32 %v162, %v213
    %v218 = vmul.f32 %v163, %v214
    %v219 = vmul.f32 %v164, %v215
    %v224 = vcombine.low %v216, %v217
    %v225 = vcombine.low %v218, %v219
    %v227 = vunpack.c.l.s4 1966171168
    %v228 = vunpack.c.0.s8 %v227
    %v229 = vlaneseq
    %v230 = vshrl.u32 %v229, 7
    %v231 = vsub.s32 %v228, %v230
    %v232 = vrot.slane %v224, %v231
    %v234 = vunpack.c.l.s4 1966171168
    %v235 = vunpack.c.0.s8 %v234
    %v236 = vlaneseq
    %v237 = vshrl.u32 %v236, 7
    %v238 = vsub.s32 %v235, %v237
    %v239 = vrot.slane %v225, %v238
    %v240 = vcombine.low %v232, %v239
    %v242 = vunpack.c.l.s4 1966171168
    %v243 = vunpack.c.0.s8 %v242
    %v244 = vlaneseq
    %v245 = vshrl.u32 %v244, 7
    %v246 = vsub.s32 %v243, %v245
    %v247 = vrot.slane %v240, %v246
    %v249 = vsub.f32 %v190, %v247
    %v250 = vlaneseq
    %v251 = vshrl.u32 %v250, 7
    %v252 = vsub.s32 0, %v251
    %v253 = vrot.slane %v212, %v252
    %v254 = vlaneseq
    %v255 = vshrl.u32 %v254, 7
    %v256 = vsub.s32 0, %v255
    %v257 = vrot.slane %v213, %v256
    %v258 = vlaneseq
    %v259 = vshrl.u32 %v258, 7
    %v260 = vsub.s32 0, %v259
    %v261 = vrot.slane %v214, %v260
    %v262 = vlaneseq
    %v263 = vshrl.u32 %v262, 7
    %v264 = vsub.s32 0, %v263
    %v265 = vrot.slane %v215, %v264
    %v266 = vmul.f32 %v41, %v253
    %v267 = vmul.f32 %v42, %v257
    %v268 = vmul.f32 %v43, %v261
    %v269 = vmul.f32 %v44, %v265
    %v270 = vmul.f32 %v45, %v253
    %v271 = vmul.f32 %v46, %v257
    %v272 = vmul.f32 %v47, %v261
    %v273 = vmul.f32 %v48, %v265
    %v274 = vmul.f32 %v49, %v253
    %v275 = vmul.f32 %v50, %v257
    %v276 = vmul.f32 %v51, %v261
    %v277 = vmul.f32 %v52, %v265
    %v278 = vmul.f32 %v53, %v253
    %v279 = vmul.f32 %v54, %v257
    %v280 = vmul.f32 %v55, %v261
    %v281 = vmul.f32 %v56, %v265
    %v282 = vmul.f32 %v57, %v253
    %v283 = vmul.f32 %v58, %v257
    %v284 = vmul.f32 %v59, %v261
    %v285 = vmul.f32 %v60, %v265
    %v287 = vlaneseq
    %v288 = vshrl.u32 %v287, 7
    %v289 = vsub.s32 0, %v288
    %v290 = vrot.slane %v249, %v289
    %v291 = vlaneseq
    %v292 = vshrl.u32 %v291, 7
    %v293 = vsub.s32 1, %v292
    %v294 = vrot.slane %v249, %v293
    %v295 = vlaneseq
    %v296 = vshrl.u32 %v295, 7
    %v297 = vsub.s32 2, %v296
    %v298 = vrot.slane %v249, %v297
    %v299 = vlaneseq
    %v300 = vshrl.u32 %v299, 7
    %v301 = vsub.s32 3, %v300
    %v302 = vrot.slane %v249, %v301
    %v307 = vadd.f32 %v266, %v290
    %v308 = vadd.f32 %v267, %v294
    %v309 = vadd.f32 %v268, %v298
    %v310 = vadd.f32 %v269, %v302
    %v311 = vadd.f32 %v270, %v290
    %v312 = vadd.f32 %v271, %v294
    %v313 = vadd.f32 %v272, %v298
    %v314 = vadd.f32 %v273, %v302
    %v315 = vadd.f32 %v274, %v290
    %v316 = vadd.f32 %v275, %v294
    %v317 = vadd.f32 %v276, %v298
    %v318 = vadd.f32 %v277, %v302
    %v319 = vadd.f32 %v278, %v290
    %v320 = vadd.f32 %v279, %v294
    %v321 = vadd.f32 %v280, %v298
    %v322 = vadd.f32 %v281, %v302
    %v323 = vadd.f32 %v282, %v290
    %v324 = vadd.f32 %v283, %v294
    %v325 = vadd.f32 %v284, %v298
    %v326 = vadd.f32 %v285, %v302
    %327 = vst [vmem:[#allocation7] sm:$0xff] %v307
    %328 = vst [vmem:[#allocation7 + $0x8] sm:$0xff] %v308
    %329 = vst [vmem:[#allocation7 + $0x10] sm:$0xff] %v309
    %330 = vst [vmem:[#allocation7 + $0x18] sm:$0xff] %v310
    %331 = vst [vmem:[#allocation7 + $0x20] sm:$0xff] %v311
    %332 = vst [vmem:[#allocation7 + $0x28] sm:$0xff] %v312
    %333 = vst [vmem:[#allocation7 + $0x30] sm:$0xff] %v313
    %334 = vst [vmem:[#allocation7 + $0x38] sm:$0xff] %v314
    %335 = vst [vmem:[#allocation7 + $0x40] sm:$0xff] %v315
    %336 = vst [vmem:[#allocation7 + $0x48] sm:$0xff] %v316
    %337 = vst [vmem:[#allocation7 + $0x50] sm:$0xff] %v317
    %338 = vst [vmem:[#allocation7 + $0x58] sm:$0xff] %v318
    %339 = vst [vmem:[#allocation7 + $0x60] sm:$0xff] %v319
    %340 = vst [vmem:[#allocation7 + $0x68] sm:$0xff] %v320
    %341 = vst [vmem:[#allocation7 + $0x70] sm:$0xff] %v321
    %342 = vst [vmem:[#allocation7 + $0x78] sm:$0xff] %v322
    %343 = vst [vmem:[#allocation7 + $0x80] sm:$0xff] %v323
    %344 = vst [vmem:[#allocation7 + $0x88] sm:$0xff] %v324
    %345 = vst [vmem:[#allocation7 + $0x90] sm:$0xff] %v325
    %346 = vst [vmem:[#allocation7 + $0x98] sm:$0xff] %v326
    // Predicated region
    $region22: #{_batchnorm1d_2d.1} parent=1 // pred_check
      _
    $region23: #{_batchnorm1d_2d.1} parent=1 // pred_check_branch
      %348 = sbr.rel (0) target = $region25
    $region24: #{_batchnorm1d_2d.1} parent=1 // pred_region
      %s350 = ssub.s32 2560, 2560
      %351 = vsyncadd [#allocation4], %s350
      %s352 = sshll.u32 [#allocation7], 4
      %s353 = int_to_ptr.vmem [resolvable:$true] %s352
      %358 = dma.vmem_to_hbm [thread:$0]  %s353, 2560, %s3, [#allocation4], 512, 512, 32
    $region25: #{_batchnorm1d_2d.1} parent=1 // pred_fallthru
      _
    // Predicated region
    $region26: #{_batchnorm1d_2d.1} parent=1 // pred_check
      _
    $region27: #{_batchnorm1d_2d.1} parent=1 // pred_check_branch
      %360 = sbr.rel (0) target = $region29
    $region28: #{_batchnorm1d_2d.1} parent=1 // pred_region
      %361 = dma.done [#allocation4], 2560
    $region29: #{_batchnorm1d_2d.1} parent=1 // pred_fallthru
      _
    %362 = vsyncpa [#allocation3], 1
    %363 = vsyncpa [#allocation6], 1
    %364 = vsyncpa [#allocation4], 1

</llo_original>
